<compile_context>
chip_gen: v6e
topology: v6e:2x2x1
jax: 0.10.0
libtpu: 0.0.40
codegen_flags: <defaults>
</compile_context>

<pallas_src>
import functools

import numpy as np
import jax
import jax.numpy as jnp
from jax.experimental import pallas as pl
from jax.experimental.pallas import tpu as pltpu


def _add_pilot_dma_kernel(p_hbm, x_hbm, o_hbm, sem, *, split, x_cols):
    # p_hbm : (B, split)            pilot rows (flattened over dims 2..), HBM
    # x_hbm : (B, x_cols)           data rows, HBM
    # o_hbm : (B, split + x_cols)   output, HBM
    # Two rectangular HBM->HBM DMAs; both are started, then both awaited, so
    # the DMA engines overlap the pilot and data copies.
    cp_p = pltpu.make_async_copy(p_hbm, o_hbm.at[:, pl.ds(0, split)], sem.at[0])
    cp_x = pltpu.make_async_copy(x_hbm, o_hbm.at[:, pl.ds(split, x_cols)], sem.at[1])
    cp_p.start()
    cp_x.start()
    cp_p.wait()
    cp_x.wait()


def add_pilot(x, pilot):
    """Pallas implementation of Add_Pilot.forward: concat((pilot, x), axis=2)."""
    assert x.ndim == pilot.ndim and x.ndim >= 3, "need rank >= 3 to cat on dim 2"
    assert x.dtype == pilot.dtype, "pilot and x must share a dtype"
    assert x.shape[:2] == pilot.shape[:2], "dims 0,1 must match"
    assert x.shape[3:] == pilot.shape[3:], "dims 3.. must match"

    lead = x.shape[:2]
    trail = x.shape[3:]
    Tp, Tx = pilot.shape[2], x.shape[2]
    Tt = Tp + Tx
    B = int(np.prod(lead))
    F = int(np.prod(trail)) if trail else 1

    # Contiguity-preserving 2-D views: the concat axis and everything after it
    # are contiguous, so flattening them turns the dim-2 concat into a
    # last-dim concat of (B, cols) arrays. These reshapes are free.
    split = Tp * F
    x_cols = Tx * F
    out_cols = Tt * F
    p2 = pilot.reshape(B, split)
    x2 = x.reshape(B, x_cols)

    kernel = functools.partial(_add_pilot_dma_kernel, split=split, x_cols=x_cols)

    out2 = pl.pallas_call(
        kernel,
        out_shape=jax.ShapeDtypeStruct((B, out_cols), x.dtype),
        # All operands stay in HBM; the kernel moves data with explicit DMAs,
        # so there is no VMEM footprint and no grid / per-step overhead.
        in_specs=[
            pl.BlockSpec(memory_space=pl.ANY),
            pl.BlockSpec(memory_space=pl.ANY),
        ],
        out_specs=pl.BlockSpec(memory_space=pl.ANY),
        scratch_shapes=[pltpu.SemaphoreType.DMA((2,))],
    )(p2, x2)

    return out2.reshape(lead + (Tt,) + trail)


if __name__ == "__main__":
    # Small deterministic OFDM-style inputs: (batch, channels, symbols, subcarriers).
    key = jax.random.PRNGKey(0)
    kx, kp = jax.random.split(key)
    N, C, F = 2, 2, 64
    Tx, Tp = 14, 2  # 14 data symbols + 2 pilot symbols -> 16 total after concat
    x = jax.random.normal(kx, (N, C, Tx, F), dtype=jnp.float32)
    pilot = jax.random.normal(kp, (N, C, Tp, F), dtype=jnp.float32)

    out = add_pilot(x, pilot)
    out = jax.block_until_ready(out)

    # Reference check (plain JAX concat, matching torch.cat((pilot, x), 2)).
    ref = jnp.concatenate([pilot, x], axis=2)
    assert out.shape == ref.shape, (out.shape, ref.shape)
    assert out.dtype == ref.dtype
    assert bool(jnp.array_equal(out, ref)), "mismatch vs reference concat"

    print("KERNEL_OK")
</pallas_src>

<mosaic_0001>
module attributes {stable_mosaic.version = 11 : i64} {
  func.func @_add_pilot_dma_kernel(%arg0: memref<4x128xf32, #tpu.memory_space<any>>, %arg1: memref<4x896xf32, #tpu.memory_space<any>>, %arg2: memref<4x1024xf32, #tpu.memory_space<any>>, %arg3: memref<2x!tpu.dma_semaphore, #tpu.memory_space<semaphore_mem>>) attributes {dimension_semantics = [], scalar_prefetch = 0 : i64, scratch_operands = 1 : i64, tpu.core_type = #tpu.core_type<tc>} {
    %c0_i32 = arith.constant 0 : i32
    %c0_i32_0 = arith.constant 0 : i32
    %c0_i32_1 = arith.constant 0 : i32
    %0 = tpu.memref_slice %arg2[%c0_i32_0, %c0_i32_1] : memref<4x1024xf32, #tpu.memory_space<any>> -> memref<4x128xf32, #tpu.memory_space<any>>
    %1 = tpu.memref_slice %arg3[%c0_i32] : memref<2x!tpu.dma_semaphore, #tpu.memory_space<semaphore_mem>> -> memref<1x!tpu.dma_semaphore, #tpu.memory_space<semaphore_mem>>
    %2 = tpu.memref_squeeze %1 : memref<1x!tpu.dma_semaphore, #tpu.memory_space<semaphore_mem>> -> memref<!tpu.dma_semaphore, #tpu.memory_space<semaphore_mem>>
    tpu.enqueue_dma source(%arg0 : memref<4x128xf32, #tpu.memory_space<any>>) target(%0 : memref<4x128xf32, #tpu.memory_space<any>>) target_semaphore(%2 : memref<!tpu.dma_semaphore, #tpu.memory_space<semaphore_mem>>)
    %c1_i32 = arith.constant 1 : i32
    %c0_i32_2 = arith.constant 0 : i32
    %c128_i32 = arith.constant 128 : i32
    %3 = tpu.memref_slice %arg2[%c0_i32_2, %c128_i32] : memref<4x1024xf32, #tpu.memory_space<any>> -> memref<4x896xf32, #tpu.memory_space<any>>
    %4 = tpu.memref_slice %arg3[%c1_i32] : memref<2x!tpu.dma_semaphore, #tpu.memory_space<semaphore_mem>> -> memref<1x!tpu.dma_semaphore, #tpu.memory_space<semaphore_mem>>
    %5 = tpu.memref_squeeze %4 : memref<1x!tpu.dma_semaphore, #tpu.memory_space<semaphore_mem>> -> memref<!tpu.dma_semaphore, #tpu.memory_space<semaphore_mem>>
    tpu.enqueue_dma source(%arg1 : memref<4x896xf32, #tpu.memory_space<any>>) target(%3 : memref<4x896xf32, #tpu.memory_space<any>>) target_semaphore(%5 : memref<!tpu.dma_semaphore, #tpu.memory_space<semaphore_mem>>)
    %c0_i32_3 = arith.constant 0 : i32
    %c0_i32_4 = arith.constant 0 : i32
    %c0_i32_5 = arith.constant 0 : i32
    %6 = tpu.memref_slice %arg2[%c0_i32_4, %c0_i32_5] : memref<4x1024xf32, #tpu.memory_space<any>> -> memref<4x128xf32, #tpu.memory_space<any>>
    %7 = tpu.memref_slice %arg3[%c0_i32_3] : memref<2x!tpu.dma_semaphore, #tpu.memory_space<semaphore_mem>> -> memref<1x!tpu.dma_semaphore, #tpu.memory_space<semaphore_mem>>
    %8 = tpu.memref_squeeze %7 : memref<1x!tpu.dma_semaphore, #tpu.memory_space<semaphore_mem>> -> memref<!tpu.dma_semaphore, #tpu.memory_space<semaphore_mem>>
    tpu.wait_dma2 semaphore(%8 : memref<!tpu.dma_semaphore, #tpu.memory_space<semaphore_mem>>) src(%arg0 : memref<4x128xf32, #tpu.memory_space<any>>) dst(%6 : memref<4x128xf32, #tpu.memory_space<any>>)
    %c1_i32_6 = arith.constant 1 : i32
    %c0_i32_7 = arith.constant 0 : i32
    %c128_i32_8 = arith.constant 128 : i32
    %9 = tpu.memref_slice %arg2[%c0_i32_7, %c128_i32_8] : memref<4x1024xf32, #tpu.memory_space<any>> -> memref<4x896xf32, #tpu.memory_space<any>>
    %10 = tpu.memref_slice %arg3[%c1_i32_6] : memref<2x!tpu.dma_semaphore, #tpu.memory_space<semaphore_mem>> -> memref<1x!tpu.dma_semaphore, #tpu.memory_space<semaphore_mem>>
    %11 = tpu.memref_squeeze %10 : memref<1x!tpu.dma_semaphore, #tpu.memory_space<semaphore_mem>> -> memref<!tpu.dma_semaphore, #tpu.memory_space<semaphore_mem>>
    tpu.wait_dma2 semaphore(%11 : memref<!tpu.dma_semaphore, #tpu.memory_space<semaphore_mem>>) src(%arg1 : memref<4x896xf32, #tpu.memory_space<any>>) dst(%9 : memref<4x896xf32, #tpu.memory_space<any>>)
    return
  }
}

</mosaic_0001>

<llo_original>
// kernel: tpu_custom_call.1
$region0: #{tpu_custom_call.1}
  #allocation0 [shape = 'u32[]', space=smem, size = 0x4, offset = 0x4, fixed_abs, tag = 'smem constant byte address 0x4 - core index']
  #allocation1 [shape = 'u32[144,128]{1,0:T(1,128)}', space=vmem, size = 0x12000, scoped, tag = 'internal scratch']
  #allocation2 [shape = 's32[2]{0}', space=sflag, size = 0x8, scoped, tag = 'scratch operand']
  #allocation3 [shape = 's32[]', space=sflag, size = 0x4, offset = 0, fixed_abs, tag = 'sflag constant byte address 0x0 - dummy sync flag']
  #allocation4 [shape = 'u32[0]{0}', space=smem, size = 0, offset = 0, fixed_abs, tag = 'smem constant byte address 0x0 - null']
  #allocation5 [shape = 's32[]', space=sflag, size = 0x4, offset = 0, fixed_abs, tag = 'sflag constant byte address 0x0 - dummy sync flag']
  #allocation6 [shape = 'u32[0]{0}', space=smem, size = 0, offset = 0, fixed_abs, tag = 'smem constant byte address 0x0 - null']
  %s0 = inlined_call_operand.hbm [shape: f32[4,128], index: 0, kind: input, shape index: {}]
  %s1 = inlined_call_operand.hbm [shape: f32[4,896], index: 1, kind: input, shape index: {}]
  %s2 = inlined_call_operand.hbm [shape: f32[4,1024], index: 2, kind: output, shape index: {}]
  %s3 = sld [smem:[#allocation0]]
  $region2: #{tpu_custom_call.1} parent=0
    _
  %s5 = ssub.s32 1, %s3
  %s6 = scalar_select 0, %s5, %s3
  %s8 = sshll.u32 1, 14
  %s9 = sxor.u32 4294967295, %s8
  %13 = dma.general %s0, 64, %s2, [#allocation2], 131072, [#allocation4], 0, 0
  %s14 = scalar_lea.hbm %s2, 64
  %s15 = scalar_lea.sflag [#allocation2], 1
  %s17 = sshll.u32 1, 14
  %s18 = sxor.u32 4294967295, %s17
  %22 = dma.general %s1, 448, %s14, %s15, 131072, [#allocation6], 0, 0
  %s23 = smul.u32 4, 1
  %s24 = smul.u32 %s23, 1
  %s25 = sshll.u32 %s24, 4
  %26 = dma.done [#allocation2], %s25
  %s27 = smul.u32 %s23, 7
  %s28 = sshll.u32 %s27, 4
  %29 = dma.done %s15, %s28
  %30 = vsyncmov [#allocation2]
  %s31 = vpop.sfrf %30
  %p32 = scmp.eq.s32.totalorder %s31, 0
  %p33 = pneg %p32
  %35 = shalt.err (%p33)
  %s36 = scalar_lea.sflag [#allocation2], 1
  %37 = vsyncmov %s36
  %s38 = vpop.sfrf %37
  %p39 = scmp.eq.s32.totalorder %s38, 0
  %p40 = pneg %p39
  %42 = shalt.err (%p40)

</llo_original>
